<compile_context>
chip_gen: v7x
topology: tpu7x:2x2x1
jax: 0.10.0
libtpu: 0.0.40
codegen_flags: <defaults>
</compile_context>

<pallas_src>
import functools

import jax
import jax.numpy as jnp
from jax import lax
from jax.experimental import pallas as pl
from jax.experimental.pallas import tpu as pltpu


def _mha_kernel(xq_ref, xkv_ref, wq_ref, wkv_ref, wd_ref, bd_ref, o_ref,
                *, num_heads, head_size):
    H, hs = num_heads, head_size
    tq, E = xq_ref.shape
    T = xkv_ref.shape[0]
    Ep = o_ref.shape[-1]

    # Hoisted casts -- each input block is read from VMEM once.
    xq = xq_ref[...].astype(jnp.bfloat16)        # (tq, E)
    xkv = xkv_ref[...].astype(jnp.bfloat16)      # (T, E)

    # Fused projections: bf16 MXU operands, f32 accumulation, staged as bf16 values.
    # wq already carries the 1/sqrt(E) scale.
    q_all = jnp.dot(xq, wq_ref[...],
                    preferred_element_type=jnp.float32).astype(jnp.bfloat16)   # (tq, E)
    kv_all = jnp.dot(xkv, wkv_ref[...],
                     preferred_element_type=jnp.float32).astype(jnp.bfloat16)  # (T, 2E)

    acc = jnp.zeros((tq, Ep), jnp.float32)
    for h in range(H):                            # static unroll over heads
        lo = h * hs
        q_h = q_all[:, lo:lo + hs]                # (tq, hs) bf16 value slice
        k_h = kv_all[:, lo:lo + hs]               # (T, hs)
        v_h = kv_all[:, E + lo:E + lo + hs]       # (T, hs)

        # Scores: contract the head dim of both Q and K (no explicit K^T / XLU transpose).
        s = lax.dot_general(q_h, k_h, (((1,), (1,)), ((), ())),
                            preferred_element_type=jnp.float32)                # (tq, T) f32

        # Softmax in f32 (VPU); divide via EUP approx reciprocal (separate slot).
        s = s - jnp.max(s, axis=-1, keepdims=True)
        p = jnp.exp(s)
        p = p * pl.reciprocal(jnp.sum(p, axis=-1, keepdims=True), approx=True)
        # (dropout on p would go here in training mode -- identity at inference)

        o_h = jnp.dot(p.astype(jnp.bfloat16), v_h,
                      preferred_element_type=jnp.float32)                      # (tq, hs) f32

        # Per-head output projection, accumulated in f32 (N = Ep is lane-dense).
        acc = acc + jnp.dot(o_h.astype(jnp.bfloat16), wd_ref[h],
                            preferred_element_type=jnp.float32)                # (tq, Ep)

    # Lane-dense store in the caller's dtype; bias added once at the end.
    o_ref[...] = (acc + bd_ref[...]).astype(o_ref.dtype)


def multi_head_attention(x, wk, wq, wv, wd, bd):
    """x: (B, T, E); wk/wq/wv: (H, E, hs); wd: (H, hs, E); bd: (1, E)."""
    B, T, E = x.shape
    H, _, hs = wq.shape
    assert H * hs == E

    # ---- One-time weight packing (wrapper side, free at run time) ---------------
    # NOTE: the PyTorch module scales by embedding_dim**0.5 (not head_size**0.5).
    inv_scale = 1.0 / (E ** 0.5)

    def to_cols(w):  # (H, E, hs) -> (E, H*hs), head-major columns
        return jnp.transpose(w, (1, 0, 2)).reshape(E, H * hs)

    wq_packed = (to_cols(wq) * inv_scale).astype(jnp.bfloat16)                 # (E, E)
    wkv_packed = jnp.concatenate([to_cols(wk), to_cols(wv)],
                                 axis=1).astype(jnp.bfloat16)                  # (E, 2E)

    Ep = pl.cdiv(E, 128) * 128                     # lane-dense output width
    wd_packed = jnp.pad(wd, ((0, 0), (0, 0), (0, Ep - E))).astype(jnp.bfloat16)  # (H, hs, Ep)
    bd_packed = jnp.pad(bd.astype(jnp.float32), ((0, 0), (0, Ep - E)))           # (1, Ep)

    # Query-tile grid axis (keeps both v7x TCs busy for B=1; finer pipelining for big T).
    tq = next((c for c in (256, 128) if T % c == 0), T)
    n_qt = T // tq

    kernel = functools.partial(_mha_kernel, num_heads=H, head_size=hs)

    # Explicit scoped-VMEM budget: double-buffered x/out blocks + single-buffered
    # weights + in-kernel values, with 2x headroom, clamped to [16 MiB, 40 MiB]
    # (safe on v5e/v6e/v7x physical VMEM).
    itemsize = x.dtype.itemsize
    est = (2 * (tq * E + T * E) * itemsize          # x blocks (query tile + full seq)
           + 2 * tq * Ep * itemsize                 # output blocks
           + (3 * E * E + H * hs * Ep) * 2 + Ep * 4 # single-buffered weights + bias
           + (tq * E + T * 2 * E) * 2               # q_all / kv_all bf16 values
           + 3 * tq * T * 4 + tq * Ep * 4)          # scores + accumulator (f32)
    vmem_limit = int(min(max(2 * est, 16 * 2 ** 20), 40 * 2 ** 20))

    def weight_spec(shape):
        # Constant-index blocks: single-buffered (no re-fetch, half the resident VMEM).
        return pl.BlockSpec(shape, lambda b, qi: (0,) * len(shape),
                            pipeline_mode=pl.Buffered(1))

    out_pad = pl.pallas_call(
        kernel,
        out_shape=jax.ShapeDtypeStruct((B, T, Ep), x.dtype),
        grid=(B, n_qt),
        in_specs=[
            pl.BlockSpec((pl.Squeezed(), tq, E), lambda b, qi: (b, qi, 0)),  # query tile
            pl.BlockSpec((pl.Squeezed(), T, E), lambda b, qi: (b, 0, 0)),    # full seq for K/V
            weight_spec((E, E)),          # wq (scale folded)
            weight_spec((E, 2 * E)),      # [wk | wv]
            weight_spec((H, hs, Ep)),     # dense, per head, lane-padded
            weight_spec((1, Ep)),         # dense bias
        ],
        out_specs=pl.BlockSpec((pl.Squeezed(), tq, Ep), lambda b, qi: (b, qi, 0)),
        compiler_params=pltpu.CompilerParams(
            dimension_semantics=("parallel", "parallel"),
            vmem_limit_bytes=vmem_limit,
        ),
    )(x, x, wq_packed, wkv_packed, wd_packed, bd_packed)

    # Drop the lane padding outside the kernel (no-op when E % 128 == 0).
    return out_pad[:, :, :E] if Ep != E else out_pad


def _reference(x, wk, wq, wv, wd, bd):
    """Pure-JAX reference mirroring the PyTorch forward (dropout = identity)."""
    B, T, E = x.shape
    H = wk.shape[0]
    heads = []
    for h in range(H):
        K = x @ wk[h]
        Q = x @ wq[h]
        V = x @ wv[h]
        A = (Q @ jnp.swapaxes(K, -2, -1)) / (E ** 0.5)
        A = jax.nn.softmax(A, axis=-1)
        heads.append(A @ V)
    concat = jnp.concatenate(heads, axis=-1)                    # (B, T, E)
    wd_full = wd.reshape(E, E)
    return concat @ wd_full + bd[0]


if __name__ == "__main__":
    # Small, deterministic setup: num_heads=4, embedding_dim=32 -> head_size=8.
    B, T, E, H = 2, 8, 32, 4
    hs = E // H

    key = jax.random.PRNGKey(0)
    kx, k1, k2, k3, k4, k5 = jax.random.split(key, 6)

    x = jax.random.normal(kx, (B, T, E), dtype=jnp.float32)
    wk = 0.1 * jax.random.normal(k1, (H, E, hs), dtype=jnp.float32)
    wq = 0.1 * jax.random.normal(k2, (H, E, hs), dtype=jnp.float32)
    wv = 0.1 * jax.random.normal(k3, (H, E, hs), dtype=jnp.float32)
    wd = 0.1 * jax.random.normal(k4, (H, hs, E), dtype=jnp.float32)
    bd = 0.1 * jax.random.normal(k5, (1, E), dtype=jnp.float32)

    out = multi_head_attention(x, wk, wq, wv, wd, bd)
    jax.block_until_ready(out)

    ref = _reference(x, wk, wq, wv, wd, bd)
    assert out.shape == (B, T, E)
    # Tolerance accounts for bf16 MXU operands + EUP approx reciprocal in the kernel.
    assert jnp.allclose(out, ref, rtol=2e-2, atol=2e-2), "mismatch vs JAX reference"

    print("KERNEL_OK")
</pallas_src>

<mosaic_0001>
module attributes {stable_mosaic.version = 11 : i64} {
  func.func @_mha_kernel(%arg0: i32, %arg1: i32, %arg2: memref<1x8x32xf32, #tpu.memory_space<vmem>>, %arg3: memref<1x8x32xf32, #tpu.memory_space<vmem>>, %arg4: memref<32x32xbf16, #tpu.memory_space<vmem>>, %arg5: memref<32x64xbf16, #tpu.memory_space<vmem>>, %arg6: memref<4x8x128xbf16, #tpu.memory_space<vmem>>, %arg7: memref<1x128xf32, #tpu.memory_space<vmem>>, %arg8: memref<1x8x128xf32, #tpu.memory_space<vmem>>) attributes {dimension_semantics = [#tpu.dimension_semantics<parallel>, #tpu.dimension_semantics<parallel>], iteration_bounds = array<i64: 2, 1>, scalar_prefetch = 0 : i64, scratch_operands = 0 : i64, tpu.core_type = #tpu.core_type<tc>, window_params = [{transform_indices = @transform_0, window_bounds = array<i64: 1, 8, 32>}, {transform_indices = @transform_1, window_bounds = array<i64: 1, 8, 32>}, {pipeline_mode = #tpu.pipeline_mode<synchronous>, transform_indices = @transform_2, window_bounds = array<i64: 32, 32>}, {pipeline_mode = #tpu.pipeline_mode<synchronous>, transform_indices = @transform_3, window_bounds = array<i64: 32, 64>}, {pipeline_mode = #tpu.pipeline_mode<synchronous>, transform_indices = @transform_4, window_bounds = array<i64: 4, 8, 128>}, {pipeline_mode = #tpu.pipeline_mode<synchronous>, transform_indices = @transform_5, window_bounds = array<i64: 1, 128>}, {transform_indices = @transform_6, window_bounds = array<i64: 1, 8, 128>}]} {
    %c0 = arith.constant 0 : index
    %c0_0 = arith.constant 0 : index
    %c0_1 = arith.constant 0 : index
    %0 = vector.load %arg2[%c0, %c0_0, %c0_1] : memref<1x8x32xf32, #tpu.memory_space<vmem>>, vector<1x8x32xf32>
    %1 = vector.shape_cast %0 : vector<1x8x32xf32> to vector<8x32xf32>
    %2 = arith.truncf %1 : vector<8x32xf32> to vector<8x32xbf16>
    %c0_2 = arith.constant 0 : index
    %c0_3 = arith.constant 0 : index
    %c0_4 = arith.constant 0 : index
    %3 = vector.load %arg3[%c0_2, %c0_3, %c0_4] : memref<1x8x32xf32, #tpu.memory_space<vmem>>, vector<1x8x32xf32>
    %4 = vector.shape_cast %3 : vector<1x8x32xf32> to vector<8x32xf32>
    %5 = arith.truncf %4 : vector<8x32xf32> to vector<8x32xbf16>
    %c0_5 = arith.constant 0 : index
    %c0_6 = arith.constant 0 : index
    %6 = vector.load %arg4[%c0_5, %c0_6] : memref<32x32xbf16, #tpu.memory_space<vmem>>, vector<32x32xbf16>
    %cst = arith.constant dense<0.000000e+00> : vector<8x32xf32>
    %7 = tpu.matmul %2, %6, %cst {dimension_numbers = #tpu.dot_dimension_numbers<[1], [0], [0], [1], [0, 0, 1, 1], [], []>} : vector<8x32xbf16>, vector<32x32xbf16>, vector<8x32xf32> -> vector<8x32xf32>
    %8 = arith.truncf %7 : vector<8x32xf32> to vector<8x32xbf16>
    %c0_7 = arith.constant 0 : index
    %c0_8 = arith.constant 0 : index
    %9 = vector.load %arg5[%c0_7, %c0_8] : memref<32x64xbf16, #tpu.memory_space<vmem>>, vector<32x64xbf16>
    %cst_9 = arith.constant dense<0.000000e+00> : vector<8x64xf32>
    %10 = tpu.matmul %5, %9, %cst_9 {dimension_numbers = #tpu.dot_dimension_numbers<[1], [0], [0], [1], [0, 0, 1, 1], [], []>} : vector<8x32xbf16>, vector<32x64xbf16>, vector<8x64xf32> -> vector<8x64xf32>
    %11 = arith.truncf %10 : vector<8x64xf32> to vector<8x64xbf16>
    %cst_10 = arith.constant 0.000000e+00 : f32
    %12 = vector.broadcast %cst_10 : f32 to vector<8x128xf32>
    %13 = vector.extract_strided_slice %8 {offsets = [0, 0], sizes = [8, 8], strides = [1, 1]} : vector<8x32xbf16> to vector<8x8xbf16>
    %14 = vector.extract_strided_slice %11 {offsets = [0, 0], sizes = [8, 8], strides = [1, 1]} : vector<8x64xbf16> to vector<8x8xbf16>
    %15 = vector.extract_strided_slice %11 {offsets = [0, 32], sizes = [8, 8], strides = [1, 1]} : vector<8x64xbf16> to vector<8x8xbf16>
    %cst_11 = arith.constant dense<0.000000e+00> : vector<8x8xf32>
    %16 = tpu.matmul %13, %14, %cst_11 {dimension_numbers = #tpu.dot_dimension_numbers<[1], [1], [0], [0], [0, 0, 1, 0], [], []>} : vector<8x8xbf16>, vector<8x8xbf16>, vector<8x8xf32> -> vector<8x8xf32>
    %cst_12 = arith.constant dense<0xFF800000> : vector<8xf32>
    %17 = vector.multi_reduction <maximumf>, %16, %cst_12 [1] : vector<8x8xf32> to vector<8xf32>
    %18 = vector.shape_cast %17 : vector<8xf32> to vector<8x1xf32>
    %19 = vector.broadcast %18 : vector<8x1xf32> to vector<8x8xf32>
    %20 = arith.subf %16, %19 : vector<8x8xf32>
    %21 = math.exp %20 : vector<8x8xf32>
    %cst_13 = arith.constant dense<0.000000e+00> : vector<8xf32>
    %22 = vector.multi_reduction <add>, %21, %cst_13 [1] : vector<8x8xf32> to vector<8xf32>
    %23 = vector.shape_cast %22 : vector<8xf32> to vector<8x1xf32>
    %24 = tpu.reciprocal %23 {approx = true} : vector<8x1xf32> -> vector<8x1xf32>
    %25 = vector.broadcast %24 : vector<8x1xf32> to vector<8x8xf32>
    %26 = arith.mulf %21, %25 : vector<8x8xf32>
    %27 = arith.truncf %26 : vector<8x8xf32> to vector<8x8xbf16>
    %cst_14 = arith.constant dense<0.000000e+00> : vector<8x8xf32>
    %28 = tpu.matmul %27, %15, %cst_14 {dimension_numbers = #tpu.dot_dimension_numbers<[1], [0], [0], [1], [0, 0, 1, 1], [], []>} : vector<8x8xbf16>, vector<8x8xbf16>, vector<8x8xf32> -> vector<8x8xf32>
    %29 = arith.truncf %28 : vector<8x8xf32> to vector<8x8xbf16>
    %c0_15 = arith.constant 0 : index
    %c0_16 = arith.constant 0 : index
    %c0_17 = arith.constant 0 : index
    %30 = vector.load %arg6[%c0_15, %c0_16, %c0_17] : memref<4x8x128xbf16, #tpu.memory_space<vmem>>, vector<1x8x128xbf16>
    %31 = vector.shape_cast %30 : vector<1x8x128xbf16> to vector<8x128xbf16>
    %cst_18 = arith.constant dense<0.000000e+00> : vector<8x128xf32>
    %32 = tpu.matmul %29, %31, %cst_18 {dimension_numbers = #tpu.dot_dimension_numbers<[1], [0], [0], [1], [0, 0, 1, 1], [], []>} : vector<8x8xbf16>, vector<8x128xbf16>, vector<8x128xf32> -> vector<8x128xf32>
    %33 = arith.addf %12, %32 : vector<8x128xf32>
    %34 = vector.extract_strided_slice %8 {offsets = [0, 8], sizes = [8, 8], strides = [1, 1]} : vector<8x32xbf16> to vector<8x8xbf16>
    %35 = vector.extract_strided_slice %11 {offsets = [0, 8], sizes = [8, 8], strides = [1, 1]} : vector<8x64xbf16> to vector<8x8xbf16>
    %36 = vector.extract_strided_slice %11 {offsets = [0, 40], sizes = [8, 8], strides = [1, 1]} : vector<8x64xbf16> to vector<8x8xbf16>
    %cst_19 = arith.constant dense<0.000000e+00> : vector<8x8xf32>
    %37 = tpu.matmul %34, %35, %cst_19 {dimension_numbers = #tpu.dot_dimension_numbers<[1], [1], [0], [0], [0, 0, 1, 0], [], []>} : vector<8x8xbf16>, vector<8x8xbf16>, vector<8x8xf32> -> vector<8x8xf32>
    %cst_20 = arith.constant dense<0xFF800000> : vector<8xf32>
    %38 = vector.multi_reduction <maximumf>, %37, %cst_20 [1] : vector<8x8xf32> to vector<8xf32>
    %39 = vector.shape_cast %38 : vector<8xf32> to vector<8x1xf32>
    %40 = vector.broadcast %39 : vector<8x1xf32> to vector<8x8xf32>
    %41 = arith.subf %37, %40 : vector<8x8xf32>
    %42 = math.exp %41 : vector<8x8xf32>
    %cst_21 = arith.constant dense<0.000000e+00> : vector<8xf32>
    %43 = vector.multi_reduction <add>, %42, %cst_21 [1] : vector<8x8xf32> to vector<8xf32>
    %44 = vector.shape_cast %43 : vector<8xf32> to vector<8x1xf32>
    %45 = tpu.reciprocal %44 {approx = true} : vector<8x1xf32> -> vector<8x1xf32>
    %46 = vector.broadcast %45 : vector<8x1xf32> to vector<8x8xf32>
    %47 = arith.mulf %42, %46 : vector<8x8xf32>
    %48 = arith.truncf %47 : vector<8x8xf32> to vector<8x8xbf16>
    %cst_22 = arith.constant dense<0.000000e+00> : vector<8x8xf32>
    %49 = tpu.matmul %48, %36, %cst_22 {dimension_numbers = #tpu.dot_dimension_numbers<[1], [0], [0], [1], [0, 0, 1, 1], [], []>} : vector<8x8xbf16>, vector<8x8xbf16>, vector<8x8xf32> -> vector<8x8xf32>
    %50 = arith.truncf %49 : vector<8x8xf32> to vector<8x8xbf16>
    %c1 = arith.constant 1 : index
    %c0_23 = arith.constant 0 : index
    %c0_24 = arith.constant 0 : index
    %51 = vector.load %arg6[%c1, %c0_23, %c0_24] : memref<4x8x128xbf16, #tpu.memory_space<vmem>>, vector<1x8x128xbf16>
    %52 = vector.shape_cast %51 : vector<1x8x128xbf16> to vector<8x128xbf16>
    %cst_25 = arith.constant dense<0.000000e+00> : vector<8x128xf32>
    %53 = tpu.matmul %50, %52, %cst_25 {dimension_numbers = #tpu.dot_dimension_numbers<[1], [0], [0], [1], [0, 0, 1, 1], [], []>} : vector<8x8xbf16>, vector<8x128xbf16>, vector<8x128xf32> -> vector<8x128xf32>
    %54 = arith.addf %33, %53 : vector<8x128xf32>
    %55 = vector.extract_strided_slice %8 {offsets = [0, 16], sizes = [8, 8], strides = [1, 1]} : vector<8x32xbf16> to vector<8x8xbf16>
    %56 = vector.extract_strided_slice %11 {offsets = [0, 16], sizes = [8, 8], strides = [1, 1]} : vector<8x64xbf16> to vector<8x8xbf16>
    %57 = vector.extract_strided_slice %11 {offsets = [0, 48], sizes = [8, 8], strides = [1, 1]} : vector<8x64xbf16> to vector<8x8xbf16>
    %cst_26 = arith.constant dense<0.000000e+00> : vector<8x8xf32>
    %58 = tpu.matmul %55, %56, %cst_26 {dimension_numbers = #tpu.dot_dimension_numbers<[1], [1], [0], [0], [0, 0, 1, 0], [], []>} : vector<8x8xbf16>, vector<8x8xbf16>, vector<8x8xf32> -> vector<8x8xf32>
    %cst_27 = arith.constant dense<0xFF800000> : vector<8xf32>
    %59 = vector.multi_reduction <maximumf>, %58, %cst_27 [1] : vector<8x8xf32> to vector<8xf32>
    %60 = vector.shape_cast %59 : vector<8xf32> to vector<8x1xf32>
    %61 = vector.broadcast %60 : vector<8x1xf32> to vector<8x8xf32>
    %62 = arith.subf %58, %61 : vector<8x8xf32>
    %63 = math.exp %62 : vector<8x8xf32>
    %cst_28 = arith.constant dense<0.000000e+00> : vector<8xf32>
    %64 = vector.multi_reduction <add>, %63, %cst_28 [1] : vector<8x8xf32> to vector<8xf32>
    %65 = vector.shape_cast %64 : vector<8xf32> to vector<8x1xf32>
    %66 = tpu.reciprocal %65 {approx = true} : vector<8x1xf32> -> vector<8x1xf32>
    %67 = vector.broadcast %66 : vector<8x1xf32> to vector<8x8xf32>
    %68 = arith.mulf %63, %67 : vector<8x8xf32>
    %69 = arith.truncf %68 : vector<8x8xf32> to vector<8x8xbf16>
    %cst_29 = arith.constant dense<0.000000e+00> : vector<8x8xf32>
    %70 = tpu.matmul %69, %57, %cst_29 {dimension_numbers = #tpu.dot_dimension_numbers<[1], [0], [0], [1], [0, 0, 1, 1], [], []>} : vector<8x8xbf16>, vector<8x8xbf16>, vector<8x8xf32> -> vector<8x8xf32>
    %71 = arith.truncf %70 : vector<8x8xf32> to vector<8x8xbf16>
    %c2 = arith.constant 2 : index
    %c0_30 = arith.constant 0 : index
    %c0_31 = arith.constant 0 : index
    %72 = vector.load %arg6[%c2, %c0_30, %c0_31] : memref<4x8x128xbf16, #tpu.memory_space<vmem>>, vector<1x8x128xbf16>
    %73 = vector.shape_cast %72 : vector<1x8x128xbf16> to vector<8x128xbf16>
    %cst_32 = arith.constant dense<0.000000e+00> : vector<8x128xf32>
    %74 = tpu.matmul %71, %73, %cst_32 {dimension_numbers = #tpu.dot_dimension_numbers<[1], [0], [0], [1], [0, 0, 1, 1], [], []>} : vector<8x8xbf16>, vector<8x128xbf16>, vector<8x128xf32> -> vector<8x128xf32>
    %75 = arith.addf %54, %74 : vector<8x128xf32>
    %76 = vector.extract_strided_slice %8 {offsets = [0, 24], sizes = [8, 8], strides = [1, 1]} : vector<8x32xbf16> to vector<8x8xbf16>
    %77 = vector.extract_strided_slice %11 {offsets = [0, 24], sizes = [8, 8], strides = [1, 1]} : vector<8x64xbf16> to vector<8x8xbf16>
    %78 = vector.extract_strided_slice %11 {offsets = [0, 56], sizes = [8, 8], strides = [1, 1]} : vector<8x64xbf16> to vector<8x8xbf16>
    %cst_33 = arith.constant dense<0.000000e+00> : vector<8x8xf32>
    %79 = tpu.matmul %76, %77, %cst_33 {dimension_numbers = #tpu.dot_dimension_numbers<[1], [1], [0], [0], [0, 0, 1, 0], [], []>} : vector<8x8xbf16>, vector<8x8xbf16>, vector<8x8xf32> -> vector<8x8xf32>
    %cst_34 = arith.constant dense<0xFF800000> : vector<8xf32>
    %80 = vector.multi_reduction <maximumf>, %79, %cst_34 [1] : vector<8x8xf32> to vector<8xf32>
    %81 = vector.shape_cast %80 : vector<8xf32> to vector<8x1xf32>
    %82 = vector.broadcast %81 : vector<8x1xf32> to vector<8x8xf32>
    %83 = arith.subf %79, %82 : vector<8x8xf32>
    %84 = math.exp %83 : vector<8x8xf32>
    %cst_35 = arith.constant dense<0.000000e+00> : vector<8xf32>
    %85 = vector.multi_reduction <add>, %84, %cst_35 [1] : vector<8x8xf32> to vector<8xf32>
    %86 = vector.shape_cast %85 : vector<8xf32> to vector<8x1xf32>
    %87 = tpu.reciprocal %86 {approx = true} : vector<8x1xf32> -> vector<8x1xf32>
    %88 = vector.broadcast %87 : vector<8x1xf32> to vector<8x8xf32>
    %89 = arith.mulf %84, %88 : vector<8x8xf32>
    %90 = arith.truncf %89 : vector<8x8xf32> to vector<8x8xbf16>
    %cst_36 = arith.constant dense<0.000000e+00> : vector<8x8xf32>
    %91 = tpu.matmul %90, %78, %cst_36 {dimension_numbers = #tpu.dot_dimension_numbers<[1], [0], [0], [1], [0, 0, 1, 1], [], []>} : vector<8x8xbf16>, vector<8x8xbf16>, vector<8x8xf32> -> vector<8x8xf32>
    %92 = arith.truncf %91 : vector<8x8xf32> to vector<8x8xbf16>
    %c3 = arith.constant 3 : index
    %c0_37 = arith.constant 0 : index
    %c0_38 = arith.constant 0 : index
    %93 = vector.load %arg6[%c3, %c0_37, %c0_38] : memref<4x8x128xbf16, #tpu.memory_space<vmem>>, vector<1x8x128xbf16>
    %94 = vector.shape_cast %93 : vector<1x8x128xbf16> to vector<8x128xbf16>
    %cst_39 = arith.constant dense<0.000000e+00> : vector<8x128xf32>
    %95 = tpu.matmul %92, %94, %cst_39 {dimension_numbers = #tpu.dot_dimension_numbers<[1], [0], [0], [1], [0, 0, 1, 1], [], []>} : vector<8x8xbf16>, vector<8x128xbf16>, vector<8x128xf32> -> vector<8x128xf32>
    %96 = arith.addf %75, %95 : vector<8x128xf32>
    %c0_40 = arith.constant 0 : index
    %c0_41 = arith.constant 0 : index
    %97 = vector.load %arg7[%c0_40, %c0_41] : memref<1x128xf32, #tpu.memory_space<vmem>>, vector<1x128xf32>
    %98 = vector.broadcast %97 : vector<1x128xf32> to vector<8x128xf32>
    %99 = arith.addf %96, %98 : vector<8x128xf32>
    %c0_42 = arith.constant 0 : index
    %c0_43 = arith.constant 0 : index
    %c0_44 = arith.constant 0 : index
    %100 = vector.load %arg8[%c0_42, %c0_43, %c0_44] : memref<1x8x128xf32, #tpu.memory_space<vmem>>, vector<1x8x128xf32>
    %101 = vector.shape_cast %100 : vector<1x8x128xf32> to vector<8x128xf32>
    %102 = vector.shape_cast %99 : vector<8x128xf32> to vector<1x8x128xf32>
    tpu.vector_store %arg8[%c0_42, %c0_43, %c0_44], %102 {strides = array<i32>} : memref<1x8x128xf32, #tpu.memory_space<vmem>>, vector<1x8x128xf32>,
    return
  }
  func.func @transform_0(%arg0: i32, %arg1: i32) -> (i32, i32, i32) {
    %c0_i32 = arith.constant 0 : i32
    %c0_i32_0 = arith.constant 0 : i32
    return %arg0, %arg1, %c0_i32 : i32, i32, i32
  }
  func.func @transform_1(%arg0: i32, %arg1: i32) -> (i32, i32, i32) {
    %c0_i32 = arith.constant 0 : i32
    %c0_i32_0 = arith.constant 0 : i32
    %c0_i32_1 = arith.constant 0 : i32
    return %arg0, %c0_i32, %c0_i32_0 : i32, i32, i32
  }
  func.func @transform_2(%arg0: i32, %arg1: i32) -> (i32, i32) {
    %c0_i32 = arith.constant 0 : i32
    %c0_i32_0 = arith.constant 0 : i32
    %c0_i32_1 = arith.constant 0 : i32
    return %c0_i32, %c0_i32_0 : i32, i32
  }
  func.func @transform_3(%arg0: i32, %arg1: i32) -> (i32, i32) {
    %c0_i32 = arith.constant 0 : i32
    %c0_i32_0 = arith.constant 0 : i32
    %c0_i32_1 = arith.constant 0 : i32
    return %c0_i32, %c0_i32_0 : i32, i32
  }
  func.func @transform_4(%arg0: i32, %arg1: i32) -> (i32, i32, i32) {
    %c0_i32 = arith.constant 0 : i32
    %c0_i32_0 = arith.constant 0 : i32
    %c0_i32_1 = arith.constant 0 : i32
    %c0_i32_2 = arith.constant 0 : i32
    return %c0_i32, %c0_i32_0, %c0_i32_1 : i32, i32, i32
  }
  func.func @transform_5(%arg0: i32, %arg1: i32) -> (i32, i32) {
    %c0_i32 = arith.constant 0 : i32
    %c0_i32_0 = arith.constant 0 : i32
    %c0_i32_1 = arith.constant 0 : i32
    return %c0_i32, %c0_i32_0 : i32, i32
  }
  func.func @transform_6(%arg0: i32, %arg1: i32) -> (i32, i32, i32) {
    %c0_i32 = arith.constant 0 : i32
    %c0_i32_0 = arith.constant 0 : i32
    return %arg0, %arg1, %c0_i32 : i32, i32, i32
  }
}

</mosaic_0001>

<llo_original>
// kernel: tpu_custom_call.1
$region0: #{tpu_custom_call.1}
  #allocation0 [shape = 'u32[]', space=smem, size = 0x4, offset = 0x4, fixed_abs, tag = 'smem constant byte address 0x4 - core index']
  #allocation1 [shape = 'u32[144,128]{1,0:T(1,128)}', space=vmem, size = 0x12000, scoped, tag = 'internal scratch']
  %s0 = inlined_call_operand.hbm [shape: f32[2,8,32], index: 0, kind: input, shape index: {}]
  %s1 = inlined_call_operand.hbm [shape: f32[2,8,32], index: 1, kind: input, shape index: {}]
  %s2 = inlined_call_operand.hbm [shape: bf16[32,32], index: 2, kind: input, shape index: {}]
  %s3 = inlined_call_operand.hbm [shape: bf16[32,64], index: 3, kind: input, shape index: {}]
  %s4 = inlined_call_operand.hbm [shape: bf16[4,8,128], index: 4, kind: input, shape index: {}]
  %s5 = inlined_call_operand.vmem [shape: f32[1,128], index: 5, kind: input, shape index: {}]
  %s6 = inlined_call_operand.hbm [shape: f32[2,8,128], index: 6, kind: output, shape index: {}]
  %s7 = sld [smem:[#allocation0]]
  $region77: #{tpu_custom_call.1} parent=0
    _
  %s9 = ssub.s32 1, %s7
  %s10 = scalar_select 0, %s9, %s7
  $region1: #{tpu_custom_call.1} parent=0
    #allocation2 [shape = 'u8[8192]{0}', space=vmem, size = 0x2000, scoped, tag = 'input window, operand 0']
    #allocation3 [shape = 's32[2]{0}', space=sflag, size = 0x8, scoped, tag = 'scoped memory for tpu_custom_call.1']
    #allocation4 [shape = 's32[2]{0}', space=sflag, size = 0x8, scoped, tag = 'scoped memory for tpu_custom_call.1']
    #allocation5 [shape = 'u8[8192]{0}', space=vmem, size = 0x2000, scoped, tag = 'input window, operand 1']
    #allocation6 [shape = 's32[2]{0}', space=sflag, size = 0x8, scoped, tag = 'scoped memory for tpu_custom_call.1']
    #allocation7 [shape = 'u8[8192]{0}', space=vmem, size = 0x2000, scoped, tag = 'input window, operand 2, single buffered']
    #allocation8 [shape = 'u8[8192]{0}', space=vmem, size = 0x2000, scoped, tag = 'input window, operand 3, single buffered']
    #allocation9 [shape = 's32[1]{0}', space=sflag, size = 0x4, scoped, tag = 'scoped memory for tpu_custom_call.1']
    #allocation10 [shape = 'u8[8192]{0}', space=vmem, size = 0x2000, scoped, tag = 'input window, operand 4, single buffered']
    #allocation11 [shape = 'u8[8192]{0}', space=vmem, size = 0x2000, scoped, tag = 'output window, operand 0']
    %11 = vsyncpa [#allocation3], 0
    %s12 = scalar_lea.sflag [#allocation3], 1
    %13 = vsyncpa %s12, 0
    %14 = vsyncpa [#allocation6], 0
    %s15 = scalar_lea.sflag [#allocation6], 1
    %16 = vsyncpa %s15, 0
    %17 = vsyncpa [#allocation9], 0
    %18 = vsyncpa [#allocation4], 0
    %s19 = scalar_lea.sflag [#allocation4], 1
    %20 = vsyncpa %s19, 0
    loop: start=0, step=1, limit=4
    $region2: #{tpu_custom_call.1} parent=1 // loop_pre_header
      _
    $region3: #{tpu_custom_call.1} parent=1 // loop_header
      %s22 = sphi 0, %s26
      %p23 = scmp.ge.s32.totalorder %s22, 4
      %s29 = sphi 0, %s41
      %s30 = sphi 0, %s37
      %s31 = sphi 0, %s29
      %s32 = sphi 0, %s30
      %s33 = sphi 0, %s31
      %s34 = sphi 0, %s32
      %s46 = sphi 0, %s48
      %s49 = sphi 0, %s46
      %s50 = sphi 0, %s49
      %s66 = sphi 0, %s50
      %s72 = sphi 0, %s74
      %s75 = sphi 0, %s72
      %s76 = sphi 0, %s75
      %s92 = sphi 0, %s76
      %s96 = sphi 0, %s96
      %s98 = sphi 0, %s96
      %s99 = sphi 0, %s98
      %s113 = sphi 0, %s99
      %s117 = sphi 0, %s117
      %s119 = sphi 0, %s117
      %s120 = sphi 0, %s119
      %s134 = sphi 0, %s120
      %s138 = sphi 0, %s138
      %s140 = sphi 0, %s138
      %s141 = sphi 0, %s140
      %s155 = sphi 0, %s141
      %s159 = sphi 0, %s159
      %s161 = sphi 0, %s159
      %s162 = sphi 0, %s161
      %s176 = sphi 0, %s162
      %s184 = sphi 0, %s186
      %s187 = sphi 0, %s184
      %s188 = sphi 0, %s187
      %s204 = sphi 0, %s188
    $region4: #{tpu_custom_call.1} parent=1 // loop_header_branch
      %25 = sbr.rel (%p23) target = $region8
    $region5: #{tpu_custom_call.1} parent=1 // loop_body
      %s27 = ssub.s32 %s22, 1
      %s28 = ssub.s32 %s22, 2
      %s35 = sadd.s32 1, %s30
      %p36 = scmp.ge.s32.totalorder %s35, 1
      %s37 = scalar_select %p36, 0, %s35
      %s38 = sadd.s32 1, %s29
      %s39 = scalar_select %p36, %s38, %s29
      %p40 = scmp.ge.s32.totalorder %s39, 2
      %s41 = scalar_select %p40, 0, %s39
      %s42 = ssub.s32 %s29, %s41
      %s43 = ssub.s32 %s30, %s37
      %s44 = sor.u32 %s42, %s43
      %p45 = scmp.eq.s32.totalorder %s44, 0
      %s47 = sadd.s32 %s46, 1
      %s48 = scalar_select %p45, %s46, %s47
      %p51 = pneg %p45
      %p52 = scmp.eq.s32.totalorder %s22, 1
      %p53 = por %p51, %p52
      %p54 = scmp.ne.s32.totalorder %s46, %s49
      %p55 = scmp.eq.s32.totalorder %s22, 0
      %p56 = por %p54, %p55
      %p57 = scmp.ne.s32.totalorder %s46, %s49
      %p58 = scmp.eq.s32.totalorder %s27, 1
      %p59 = por %p57, %p58
      %p60 = scmp.ne.s32.totalorder %s49, %s50
      %p61 = scmp.eq.s32.totalorder %s27, 0
      %p62 = por %p60, %p61
      %p63 = scmp.ne.s32.totalorder %s49, %s50
      %p64 = scmp.eq.s32.totalorder %s28, 1
      %p65 = por %p63, %p64
      %p67 = scmp.ne.s32.totalorder %s50, %s66
      %p68 = scmp.eq.s32.totalorder %s28, 0
      %p69 = por %p67, %p68
      %s70 = ssub.s32 %s29, %s41
      %p71 = scmp.eq.s32.totalorder %s70, 0
      %s73 = sadd.s32 %s72, 1
      %s74 = scalar_select %p71, %s72, %s73
      %p77 = pneg %p71
      %p78 = scmp.eq.s32.totalorder %s22, 1
      %p79 = por %p77, %p78
      %p80 = scmp.ne.s32.totalorder %s72, %s75
      %p81 = scmp.eq.s32.totalorder %s22, 0
      %p82 = por %p80, %p81
      %p83 = scmp.ne.s32.totalorder %s72, %s75
      %p84 = scmp.eq.s32.totalorder %s27, 1
      %p85 = por %p83, %p84
      %p86 = scmp.ne.s32.totalorder %s75, %s76
      %p87 = scmp.eq.s32.totalorder %s27, 0
      %p88 = por %p86, %p87
      %p89 = scmp.ne.s32.totalorder %s75, %s76
      %p90 = scmp.eq.s32.totalorder %s28, 1
      %p91 = por %p89, %p90
      %p93 = scmp.ne.s32.totalorder %s76, %s92
      %p94 = scmp.eq.s32.totalorder %s28, 0
      %p95 = por %p93, %p94
      %s97 = sadd.s32 %s96, 1
      %p100 = scmp.eq.s32.totalorder %s22, 1
      %p101 = scmp.ne.s32.totalorder %s96, %s98
      %p102 = scmp.eq.s32.totalorder %s22, 0
      %p103 = por %p101, %p102
      %p104 = scmp.ne.s32.totalorder %s96, %s98
      %p105 = scmp.eq.s32.totalorder %s27, 1
      %p106 = por %p104, %p105
      %p107 = scmp.ne.s32.totalorder %s98, %s99
      %p108 = scmp.eq.s32.totalorder %s27, 0
      %p109 = por %p107, %p108
      %p110 = scmp.ne.s32.totalorder %s98, %s99
      %p111 = scmp.eq.s32.totalorder %s28, 1
      %p112 = por %p110, %p111
      %p114 = scmp.ne.s32.totalorder %s99, %s113
      %p115 = scmp.eq.s32.totalorder %s28, 0
      %p116 = por %p114, %p115
      %s118 = sadd.s32 %s117, 1
      %p121 = scmp.eq.s32.totalorder %s22, 1
      %p122 = scmp.ne.s32.totalorder %s117, %s119
      %p123 = scmp.eq.s32.totalorder %s22, 0
      %p124 = por %p122, %p123
      %p125 = scmp.ne.s32.totalorder %s117, %s119
      %p126 = scmp.eq.s32.totalorder %s27, 1
      %p127 = por %p125, %p126
      %p128 = scmp.ne.s32.totalorder %s119, %s120
      %p129 = scmp.eq.s32.totalorder %s27, 0
      %p130 = por %p128, %p129
      %p131 = scmp.ne.s32.totalorder %s119, %s120
      %p132 = scmp.eq.s32.totalorder %s28, 1
      %p133 = por %p131, %p132
      %p135 = scmp.ne.s32.totalorder %s120, %s134
      %p136 = scmp.eq.s32.totalorder %s28, 0
      %p137 = por %p135, %p136
      %s139 = sadd.s32 %s138, 1
      %p142 = scmp.eq.s32.totalorder %s22, 1
      %p143 = scmp.ne.s32.totalorder %s138, %s140
      %p144 = scmp.eq.s32.totalorder %s22, 0
      %p145 = por %p143, %p144
      %p146 = scmp.ne.s32.totalorder %s138, %s140
      %p147 = scmp.eq.s32.totalorder %s27, 1
      %p148 = por %p146, %p147
      %p149 = scmp.ne.s32.totalorder %s140, %s141
      %p150 = scmp.eq.s32.totalorder %s27, 0
      %p151 = por %p149, %p150
      %p152 = scmp.ne.s32.totalorder %s140, %s141
      %p153 = scmp.eq.s32.totalorder %s28, 1
      %p154 = por %p152, %p153
      %p156 = scmp.ne.s32.totalorder %s141, %s155
      %p157 = scmp.eq.s32.totalorder %s28, 0
      %p158 = por %p156, %p157
      %s160 = sadd.s32 %s159, 1
      %p163 = scmp.eq.s32.totalorder %s22, 1
      %p164 = scmp.ne.s32.totalorder %s159, %s161
      %p165 = scmp.eq.s32.totalorder %s22, 0
      %p166 = por %p164, %p165
      %p167 = scmp.ne.s32.totalorder %s159, %s161
      %p168 = scmp.eq.s32.totalorder %s27, 1
      %p169 = por %p167, %p168
      %p170 = scmp.ne.s32.totalorder %s161, %s162
      %p171 = scmp.eq.s32.totalorder %s27, 0
      %p172 = por %p170, %p171
      %p173 = scmp.ne.s32.totalorder %s161, %s162
      %p174 = scmp.eq.s32.totalorder %s28, 1
      %p175 = por %p173, %p174
      %p177 = scmp.ne.s32.totalorder %s162, %s176
      %p178 = scmp.eq.s32.totalorder %s28, 0
      %p179 = por %p177, %p178
      %s180 = ssub.s32 %s29, %s41
      %s181 = ssub.s32 %s30, %s37
      %s182 = sor.u32 %s180, %s181
      %p183 = scmp.eq.s32.totalorder %s182, 0
      %s185 = sadd.s32 %s184, 1
      %s186 = scalar_select %p183, %s184, %s185
      %p189 = pneg %p183
      %p190 = scmp.eq.s32.totalorder %s22, 1
      %p191 = por %p189, %p190
      %p192 = scmp.ne.s32.totalorder %s184, %s187
      %p193 = scmp.eq.s32.totalorder %s22, 0
      %p194 = por %p192, %p193
      %p195 = scmp.ne.s32.totalorder %s184, %s187
      %p196 = scmp.eq.s32.totalorder %s27, 1
      %p197 = por %p195, %p196
      %p198 = scmp.ne.s32.totalorder %s187, %s188
      %p199 = scmp.eq.s32.totalorder %s27, 0
      %p200 = por %p198, %p199
      %p201 = scmp.ne.s32.totalorder %s187, %s188
      %p202 = scmp.eq.s32.totalorder %s28, 1
      %p203 = por %p201, %p202
      %p205 = scmp.ne.s32.totalorder %s188, %s204
      %p206 = scmp.eq.s32.totalorder %s28, 0
      %p207 = por %p205, %p206
      %p208 = scmp.le.s32.totalorder 1, %s22
      %p209 = scmp.lt.s32.totalorder %s22, 3
      %p210 = pnand %p208, %p209
      %p211 = pneg %p210
      // Predicated region
      $region9: #{tpu_custom_call.1} parent=5 // pred_check
        _
      $region10: #{tpu_custom_call.1} parent=5 // pred_check_branch
        %213 = sbr.rel (%p210) target = $region12
      $region11: #{tpu_custom_call.1} parent=5 // pred_region
        %s214 = ssub.s32 %s22, 1
        // Predicated region
        $region13: #{tpu_custom_call.1} parent=11 // pred_check
          %p215 = pneg %p109
        $region14: #{tpu_custom_call.1} parent=11 // pred_check_branch
          %217 = sbr.rel (%p215) target = $region16
        $region15: #{tpu_custom_call.1} parent=11 // pred_region
          %s219 = ssub.s32 256, 256
          %220 = vsyncadd [#allocation6], %s219
          %s221 = sshll.u32 [#allocation7], 4
          %s222 = int_to_ptr.vmem [resolvable:$true] %s221
          %227 = dma.hbm_to_vmem [thread:$0]  %s2, 256, %s222, [#allocation6], 64, 64, 4
        $region16: #{tpu_custom_call.1} parent=11 // pred_fallthru
          _
        // Predicated region
        $region17: #{tpu_custom_call.1} parent=11 // pred_check
          %p228 = pneg %p130
        $region18: #{tpu_custom_call.1} parent=11 // pred_check_branch
          %230 = sbr.rel (%p228) target = $region20
        $region19: #{tpu_custom_call.1} parent=11 // pred_region
          %s232 = ssub.s32 256, 256
          %233 = vsyncadd [#allocation9], %s232
          %s234 = sshll.u32 [#allocation8], 4
          %s235 = int_to_ptr.vmem [resolvable:$true] %s234
          %240 = dma.hbm_to_vmem [thread:$0]  %s3, 256, %s235, [#allocation9], 64, 64, 4
        $region20: #{tpu_custom_call.1} parent=11 // pred_fallthru
          _
        // Predicated region
        $region21: #{tpu_custom_call.1} parent=11 // pred_check
          %p241 = pneg %p151
        $region22: #{tpu_custom_call.1} parent=11 // pred_check_branch
          %243 = sbr.rel (%p241) target = $region24
        $region23: #{tpu_custom_call.1} parent=11 // pred_region
          %s245 = ssub.s32 256, 256
          %246 = vsyncadd [#allocation9], %s245
          %s247 = sshll.u32 [#allocation10], 4
          %s248 = int_to_ptr.vmem [resolvable:$true] %s247
          %253 = dma.hbm_to_vmem [thread:$0]  %s4, 256, %s248, [#allocation9], 64, 64, 4
        $region24: #{tpu_custom_call.1} parent=11 // pred_fallthru
          _
        // Predicated region
        $region25: #{tpu_custom_call.1} parent=11 // pred_check
          %p254 = pneg %p172
        $region26: #{tpu_custom_call.1} parent=11 // pred_check_branch
          %256 = sbr.rel (%p254) target = $region28
        $region27: #{tpu_custom_call.1} parent=11 // pred_region
          _
        $region28: #{tpu_custom_call.1} parent=11 // pred_fallthru
          _
      $region12: #{tpu_custom_call.1} parent=5 // pred_fallthru
        _
      %p257 = scmp.lt.s32.totalorder %s22, 2
      // Predicated region
      $region29: #{tpu_custom_call.1} parent=5 // pred_check
        %p258 = pneg %p257
      $region30: #{tpu_custom_call.1} parent=5 // pred_check_branch
        %260 = sbr.rel (%p258) target = $region32
      $region31: #{tpu_custom_call.1} parent=5 // pred_region
        // Predicated region
        $region33: #{tpu_custom_call.1} parent=31 // pred_check
          %p261 = pneg %p56
        $region34: #{tpu_custom_call.1} parent=31 // pred_check_branch
          %263 = sbr.rel (%p261) target = $region36
        $region35: #{tpu_custom_call.1} parent=31 // pred_region
          %s264 = sand.u32 %s46, 1
          %s265 = scalar_lea.sflag [#allocation3], %s264
          %s266 = sand.u32 %s46, 1
          %s267 = smul.addr %s266, 8
          %s268 = scalar_lea.vmem [#allocation2], %s267
          %s270 = ssub.s32 128, 128
          %271 = vsyncadd %s265, %s270
          %s272 = sadd.s32 %s30, %s29
          %s273 = smul.addr %s272, 128
          %s274 = scalar_lea.hbm %s0, %s273
          %s276 = sshll.u32 %s268, 4
          %s277 = int_to_ptr.vmem [resolvable:$true] %s276
          %279 = dma.hbm_to_vmem [thread:$0]  %s274, 128, %s277, %s265
        $region36: #{tpu_custom_call.1} parent=31 // pred_fallthru
          _
        // Predicated region
        $region37: #{tpu_custom_call.1} parent=31 // pred_check
          %p280 = pneg %p82
        $region38: #{tpu_custom_call.1} parent=31 // pred_check_branch
          %282 = sbr.rel (%p280) target = $region40
        $region39: #{tpu_custom_call.1} parent=31 // pred_region
          %s283 = sand.u32 %s22, 1
          %s284 = scalar_lea.sflag [#allocation6], %s283
          %s285 = sand.u32 %s72, 1
          %s286 = smul.addr %s285, 8
          %s287 = scalar_lea.vmem [#allocation5], %s286
          %s289 = ssub.s32 128, 128
          %290 = vsyncadd %s284, %s289
          %s291 = smul.addr %s29, 128
          %s292 = scalar_lea.hbm %s1, %s291
          %s294 = sshll.u32 %s287, 4
          %s295 = int_to_ptr.vmem [resolvable:$true] %s294
          %297 = dma.hbm_to_vmem [thread:$0]  %s292, 128, %s295, %s284
        $region40: #{tpu_custom_call.1} parent=31 // pred_fallthru
          _
      $region32: #{tpu_custom_call.1} parent=5 // pred_fallthru
        _
      %p298 = scmp.le.s32.totalorder 1, %s22
      %p299 = scmp.lt.s32.totalorder %s22, 3
      %p300 = pnand %p298, %p299
      %p301 = pneg %p300
      // Predicated region
      $region41: #{tpu_custom_call.1} parent=5 // pred_check
        _
      $region42: #{tpu_custom_call.1} parent=5 // pred_check_branch
        %303 = sbr.rel (%p300) target = $region44
      $region43: #{tpu_custom_call.1} parent=5 // pred_region
        %s304 = ssub.s32 %s22, 1
        %s305 = sand.u32 %s49, 1
        %s306 = scalar_lea.sflag [#allocation3], %s305
        %s307 = sand.u32 %s49, 1
        %s308 = smul.addr %s307, 8
        %s309 = scalar_lea.vmem [#allocation2], %s308
        // Predicated region
        $region45: #{tpu_custom_call.1} parent=43 // pred_check
          %p310 = pneg %p62
        $region46: #{tpu_custom_call.1} parent=43 // pred_check_branch
          %312 = sbr.rel (%p310) target = $region48
        $region47: #{tpu_custom_call.1} parent=43 // pred_region
          %313 = dma.done %s306, 128
        $region48: #{tpu_custom_call.1} parent=43 // pred_fallthru
          _
        %s314 = sand.u32 %s27, 1
        %s315 = scalar_lea.sflag [#allocation6], %s314
        %s316 = sand.u32 %s75, 1
        %s317 = smul.addr %s316, 8
        %s318 = scalar_lea.vmem [#allocation5], %s317
        // Predicated region
        $region49: #{tpu_custom_call.1} parent=43 // pred_check
          %p319 = pneg %p88
        $region50: #{tpu_custom_call.1} parent=43 // pred_check_branch
          %321 = sbr.rel (%p319) target = $region52
        $region51: #{tpu_custom_call.1} parent=43 // pred_region
          %322 = dma.done %s315, 128
        $region52: #{tpu_custom_call.1} parent=43 // pred_fallthru
          _
        // Predicated region
        $region53: #{tpu_custom_call.1} parent=43 // pred_check
          %p323 = pneg %p109
        $region54: #{tpu_custom_call.1} parent=43 // pred_check_branch
          %325 = sbr.rel (%p323) target = $region56
        $region55: #{tpu_custom_call.1} parent=43 // pred_region
          %326 = dma.done [#allocation6], 256
        $region56: #{tpu_custom_call.1} parent=43 // pred_fallthru
          _
        // Predicated region
        $region57: #{tpu_custom_call.1} parent=43 // pred_check
          %p327 = pneg %p130
        $region58: #{tpu_custom_call.1} parent=43 // pred_check_branch
          %329 = sbr.rel (%p327) target = $region60
        $region59: #{tpu_custom_call.1} parent=43 // pred_region
          %330 = dma.done [#allocation9], 256
        $region60: #{tpu_custom_call.1} parent=43 // pred_fallthru
          _
        // Predicated region
        $region61: #{tpu_custom_call.1} parent=43 // pred_check
          %p331 = pneg %p151
        $region62: #{tpu_custom_call.1} parent=43 // pred_check_branch
          %333 = sbr.rel (%p331) target = $region64
        $region63: #{tpu_custom_call.1} parent=43 // pred_region
          %334 = dma.done [#allocation9], 256
        $region64: #{tpu_custom_call.1} parent=43 // pred_fallthru
          _
        %s335 = sand.u32 %s49, 1
        %s336 = scalar_lea.sflag [#allocation3], %s335
        %s337 = sand.u32 %s49, 1
        %s338 = smul.addr %s337, 8
        %s339 = scalar_lea.vmem [#allocation2], %s338
        %p340 = pneg %p62
        %p341 = pneg %p59
        %s342 = sand.u32 %s27, 1
        %s343 = scalar_lea.sflag [#allocation6], %s342
        %s344 = sand.u32 %s75, 1
        %s345 = smul.addr %s344, 8
        %s346 = scalar_lea.vmem [#allocation5], %s345
        %p347 = pneg %p88
        %p348 = pneg %p85
        %p349 = pneg %p109
        %p350 = pneg %p106
        %p351 = pneg %p130
        %p352 = pneg %p127
        %p353 = pneg %p151
        %p354 = pneg %p148
        %p355 = pneg %p172
        %p356 = pneg %p169
        %p357 = pneg %p200
        %p358 = pneg %p197
        %s359 = sand.u32 %s187, 1
        %s360 = scalar_lea.sflag [#allocation4], %s359
        %s361 = sand.u32 %s187, 1
        %s362 = smul.addr %s361, 8
        %s363 = scalar_lea.vmem [#allocation11], %s362
        %v365 = vld [vmem:[%s309] sm:$0xff]
        %v366 = vpack.c.bf16 %v365, %v365
        %v367 = vld [vmem:[%s318] sm:$0xff]
        %v368 = vpack.c.bf16 %v367, %v367
        %v369 = vld [vmem:[#allocation7] sm:$0xf]
        %v370 = vld [vmem:[#allocation7 + $0x4] sm:$0xf]
        %v371 = vld [vmem:[#allocation7 + $0x8] sm:$0xf]
        %v372 = vld [vmem:[#allocation7 + $0xc] sm:$0xf]
        %v377 = vunpack.c.l.b16 %v369
        %v378 = vunpack.c.l.b16 %v370
        %v379 = vunpack.c.l.b16 %v371
        %v380 = vunpack.c.l.b16 %v372
        %v381 = vpack.c.b16 %v378, %v377
        %v382 = vpack.c.b16 %v380, %v379
        %vm385 = vcmask 261120
        %v387 = vsel %vm385, %v366, 0
        %389 = vmatprep.subr.bf16.mxu0 0
        %390 = vmatpush1.bf16.msra.mxu0 %v381
        %391 = vmatprep.subr.bf16.mxu0 0
        %392 = vmatpush1.bf16.msra.mxu0 %v382
        %393 = vmatprep.subr.bf16.mxu0 0
        %394 = vmatpush1.bf16.msra.mxu0 0
        %395 = vmatprep.subr.bf16.mxu0 0
        %396 = vmatpush1.bf16.msra.mxu0 0
        %397 = vmatprep.subr.bf16.mxu0 0
        %398 = vmatpush1.bf16.msra.mxu0 0
        %399 = vmatprep.subr.bf16.mxu0 0
        %400 = vmatpush1.bf16.msra.mxu0 0
        %401 = vmatprep.subr.bf16.mxu0 0
        %402 = vmatpush1.bf16.msra.mxu0 0
        %403 = vmatprep.subr.bf16.mxu0 0
        %404 = vmatpush1.bf16.msra.mxu0 0
        %405 = vmatprep.subr.bf16.mxu0 0
        %406 = vmatpush1.bf16.msra.mxu0 0
        %407 = vmatprep.subr.bf16.mxu0 0
        %408 = vmatpush1.bf16.msra.mxu0 0
        %409 = vmatprep.subr.bf16.mxu0 0
        %410 = vmatpush1.bf16.msra.mxu0 0
        %411 = vmatprep.subr.bf16.mxu0 0
        %412 = vmatpush1.bf16.msra.mxu0 0
        %413 = vmatprep.subr.bf16.mxu0 0
        %414 = vmatpush1.bf16.msra.mxu0 0
        %415 = vmatprep.subr.bf16.mxu0 0
        %416 = vmatpush1.bf16.msra.mxu0 0
        %417 = vmatprep.subr.bf16.mxu0 0
        %418 = vmatpush1.bf16.msra.mxu0 0
        %419 = vmatprep.subr.bf16.mxu0 0
        %420 = vmatpush1.bf16.msra.mxu0 0
        %421 = vmatprep.mubr.bf16.mxu0 0
        %422 = vmatmul.mubr.bf16.gmra.mrb[0].mxu0 %v387
        %v423 = vpop.f32.mrb[0].mxu0
        %v424 = vadd.f32 0.0, %v423
        %v425 = vpop.f32.mrb[0].mxu0
        %v426 = vpop.f32.mrb[0].mxu0
        %v427 = vpop.f32.mrb[0].mxu0
        %428 = vdwg.mxu0
        %v429 = vpack.c.bf16 %v424, %v424
        %v430 = vld [vmem:[#allocation8] sm:$0xf]
        %v431 = vld [vmem:[#allocation8 + $0x4] sm:$0xf]
        %v432 = vld [vmem:[#allocation8 + $0x8] sm:$0xf]
        %v433 = vld [vmem:[#allocation8 + $0xc] sm:$0xf]
        %v438 = vunpack.c.l.b16 %v430
        %v439 = vunpack.c.l.b16 %v431
        %v440 = vunpack.c.l.b16 %v432
        %v441 = vunpack.c.l.b16 %v433
        %v442 = vpack.c.b16 %v439, %v438
        %v443 = vpack.c.b16 %v441, %v440
        %v447 = vsel %vm385, %v368, 0
        %449 = vmatprep.subr.bf16.mxu0 0
        %450 = vmatpush1.bf16.msra.mxu0 %v442
        %451 = vmatprep.subr.bf16.mxu0 0
        %452 = vmatpush1.bf16.msra.mxu0 %v443
        %453 = vmatprep.subr.bf16.mxu0 0
        %454 = vmatpush1.bf16.msra.mxu0 0
        %455 = vmatprep.subr.bf16.mxu0 0
        %456 = vmatpush1.bf16.msra.mxu0 0
        %457 = vmatprep.subr.bf16.mxu0 0
        %458 = vmatpush1.bf16.msra.mxu0 0
        %459 = vmatprep.subr.bf16.mxu0 0
        %460 = vmatpush1.bf16.msra.mxu0 0
        %461 = vmatprep.subr.bf16.mxu0 0
        %462 = vmatpush1.bf16.msra.mxu0 0
        %463 = vmatprep.subr.bf16.mxu0 0
        %464 = vmatpush1.bf16.msra.mxu0 0
        %465 = vmatprep.subr.bf16.mxu0 0
        %466 = vmatpush1.bf16.msra.mxu0 0
        %467 = vmatprep.subr.bf16.mxu0 0
        %468 = vmatpush1.bf16.msra.mxu0 0
        %469 = vmatprep.subr.bf16.mxu0 0
        %470 = vmatpush1.bf16.msra.mxu0 0
        %471 = vmatprep.subr.bf16.mxu0 0
        %472 = vmatpush1.bf16.msra.mxu0 0
        %473 = vmatprep.subr.bf16.mxu0 0
        %474 = vmatpush1.bf16.msra.mxu0 0
        %475 = vmatprep.subr.bf16.mxu0 0
        %476 = vmatpush1.bf16.msra.mxu0 0
        %477 = vmatprep.subr.bf16.mxu0 0
        %478 = vmatpush1.bf16.msra.mxu0 0
        %479 = vmatprep.subr.bf16.mxu0 0
        %480 = vmatpush1.bf16.msra.mxu0 0
        %481 = vmatprep.mubr.bf16.mxu0 0
        %482 = vmatmul.mubr.bf16.gmra.mrb[0].mxu0 %v447
        %v483 = vpop.f32.mrb[0].mxu0
        %v484 = vadd.f32 0.0, %v483
        %v485 = vpop.f32.mrb[0].mxu0
        %v486 = vpop.f32.mrb[0].mxu0
        %v487 = vpop.f32.mrb[0].mxu0
        %488 = vdwg.mxu0
        %v489 = vpack.c.bf16 %v484, %v484
        %vm490 = vcmask 64512
        %v492 = vsel %vm490, %v429, 0
        %v495 = vsel %vm490, %v489, 0
        %497 = vmatprep.subr.bf16.mxu0 0
        %498 = vmatpush1.bf16.xpose.msra.mxu0 %v495
        %499 = vmatprep.subr.bf16.mxu0 0
        %500 = vmatpush1.bf16.xpose.msra.mxu0 0
        %501 = vmatprep.subr.bf16.mxu0 0
        %502 = vmatpush1.bf16.xpose.msra.mxu0 0
        %503 = vmatprep.subr.bf16.mxu0 0
        %504 = vmatpush1.bf16.xpose.msra.mxu0 0
        %505 = vmatprep.subr.bf16.mxu0 0
        %506 = vmatpush1.bf16.xpose.msra.mxu0 0
        %507 = vmatprep.subr.bf16.mxu0 0
        %508 = vmatpush1.bf16.xpose.msra.mxu0 0
        %509 = vmatprep.subr.bf16.mxu0 0
        %510 = vmatpush1.bf16.xpose.msra.mxu0 0
        %511 = vmatprep.subr.bf16.mxu0 0
        %512 = vmatpush1.bf16.xpose.msra.mxu0 0
        %513 = vmatprep.subr.bf16.mxu0 0
        %514 = vmatpush1.bf16.xpose.msra.mxu0 0
        %515 = vmatprep.subr.bf16.mxu0 0
        %516 = vmatpush1.bf16.xpose.msra.mxu0 0
        %517 = vmatprep.subr.bf16.mxu0 0
        %518 = vmatpush1.bf16.xpose.msra.mxu0 0
        %519 = vmatprep.subr.bf16.mxu0 0
        %520 = vmatpush1.bf16.xpose.msra.mxu0 0
        %521 = vmatprep.subr.bf16.mxu0 0
        %522 = vmatpush1.bf16.xpose.msra.mxu0 0
        %523 = vmatprep.subr.bf16.mxu0 0
        %524 = vmatpush1.bf16.xpose.msra.mxu0 0
        %525 = vmatprep.subr.bf16.mxu0 0
        %526 = vmatpush1.bf16.xpose.msra.mxu0 0
        %527 = vmatprep.subr.bf16.mxu0 0
        %528 = vmatpush1.bf16.xpose.msra.mxu0 0
        %529 = vmatprep.mubr.bf16.mxu0 0
        %530 = vmatmul.mubr.bf16.gmra.mrb[0].mxu0 %v492
        %v531 = vpop.f32.mrb[0].mxu0
        %v532 = vadd.f32 0.0, %v531
        %v533 = vpop.f32.mrb[0].mxu0
        %v534 = vpop.f32.mrb[0].mxu0
        %v535 = vpop.f32.mrb[0].mxu0
        %536 = vdwg.mxu0
        %v537 = vsel %vm490, %v532, -inf
        %538 = vmax.xlane.f32.xlu0 %v537
        %v539 = vpop.xlane.xlu0 %538
        %v540 = vsub.f32 %v532, %v539
        %v541 = vmul.f32 %v540, 1.442695
        %v542 = vpow.pop %v541
        %v543 = vsel %vm490, %v542, 0.0
        %544 = vadd.xlane.f32.xlu0 %v543
        %v545 = vpop.xlane.xlu0 %544
        %v546 = vrcp.pop %v545
        %v547 = vmul.f32 %v542, %v546
        %v548 = vpack.c.bf16 %v547, %v547
        %550 = vrot.lane.b32.xlu0 %v489, 96
        %v551 = vpop.permute.xlu0 %550
        %v553 = vsel %vm490, %v548, 0
        %vm555 = vcmask 1043456
        %v557 = vsel %vm555, %v551, 0
        %559 = vmatprep.subr.bf16.mxu0 0
        %560 = vmatpush1.bf16.msra.mxu0 %v557
        %561 = vmatprep.subr.bf16.mxu0 0
        %562 = vmatpush1.bf16.msra.mxu0 0
        %563 = vmatprep.subr.bf16.mxu0 0
        %564 = vmatpush1.bf16.msra.mxu0 0
        %565 = vmatprep.subr.bf16.mxu0 0
        %566 = vmatpush1.bf16.msra.mxu0 0
        %567 = vmatprep.subr.bf16.mxu0 0
        %568 = vmatpush1.bf16.msra.mxu0 0
        %569 = vmatprep.subr.bf16.mxu0 0
        %570 = vmatpush1.bf16.msra.mxu0 0
        %571 = vmatprep.subr.bf16.mxu0 0
        %572 = vmatpush1.bf16.msra.mxu0 0
        %573 = vmatprep.subr.bf16.mxu0 0
        %574 = vmatpush1.bf16.msra.mxu0 0
        %575 = vmatprep.subr.bf16.mxu0 0
        %576 = vmatpush1.bf16.msra.mxu0 0
        %577 = vmatprep.subr.bf16.mxu0 0
        %578 = vmatpush1.bf16.msra.mxu0 0
        %579 = vmatprep.subr.bf16.mxu0 0
        %580 = vmatpush1.bf16.msra.mxu0 0
        %581 = vmatprep.subr.bf16.mxu0 0
        %582 = vmatpush1.bf16.msra.mxu0 0
        %583 = vmatprep.subr.bf16.mxu0 0
        %584 = vmatpush1.bf16.msra.mxu0 0
        %585 = vmatprep.subr.bf16.mxu0 0
        %586 = vmatpush1.bf16.msra.mxu0 0
        %587 = vmatprep.subr.bf16.mxu0 0
        %588 = vmatpush1.bf16.msra.mxu0 0
        %589 = vmatprep.subr.bf16.mxu0 0
        %590 = vmatpush1.bf16.msra.mxu0 0
        %591 = vmatprep.mubr.bf16.mxu0 0
        %592 = vmatmul.mubr.bf16.gmra.mrb[0].mxu0 %v553
        %v593 = vpop.f32.mrb[0].mxu0
        %v594 = vadd.f32 0.0, %v593
        %v595 = vpop.f32.mrb[0].mxu0
        %v596 = vpop.f32.mrb[0].mxu0
        %v597 = vpop.f32.mrb[0].mxu0
        %598 = vdwg.mxu0
        %v599 = vpack.c.bf16 %v594, %v594
        %v600 = vld [vmem:[#allocation10] sm:$0xf]
        %602 = vrot.lane.b32.xlu0 %v429, 120
        %v603 = vpop.permute.xlu0 %602
        %604 = vrot.lane.b32.xlu0 %v489, 120
        %v605 = vpop.permute.xlu0 %604
        %v607 = vsel %vm490, %v603, 0
        %v610 = vsel %vm490, %v605, 0
        %612 = vmatprep.subr.bf16.mxu0 0
        %613 = vmatpush1.bf16.xpose.msra.mxu0 %v610
        %614 = vmatprep.subr.bf16.mxu0 0
        %615 = vmatpush1.bf16.xpose.msra.mxu0 0
        %616 = vmatprep.subr.bf16.mxu0 0
        %617 = vmatpush1.bf16.xpose.msra.mxu0 0
        %618 = vmatprep.subr.bf16.mxu0 0
        %619 = vmatpush1.bf16.xpose.msra.mxu0 0
        %620 = vmatprep.subr.bf16.mxu0 0
        %621 = vmatpush1.bf16.xpose.msra.mxu0 0
        %622 = vmatprep.subr.bf16.mxu0 0
        %623 = vmatpush1.bf16.xpose.msra.mxu0 0
        %624 = vmatprep.subr.bf16.mxu0 0
        %625 = vmatpush1.bf16.xpose.msra.mxu0 0
        %626 = vmatprep.subr.bf16.mxu0 0
        %627 = vmatpush1.bf16.xpose.msra.mxu0 0
        %628 = vmatprep.subr.bf16.mxu0 0
        %629 = vmatpush1.bf16.xpose.msra.mxu0 0
        %630 = vmatprep.subr.bf16.mxu0 0
        %631 = vmatpush1.bf16.xpose.msra.mxu0 0
        %632 = vmatprep.subr.bf16.mxu0 0
        %633 = vmatpush1.bf16.xpose.msra.mxu0 0
        %634 = vmatprep.subr.bf16.mxu0 0
        %635 = vmatpush1.bf16.xpose.msra.mxu0 0
        %636 = vmatprep.subr.bf16.mxu0 0
        %637 = vmatpush1.bf16.xpose.msra.mxu0 0
        %638 = vmatprep.subr.bf16.mxu0 0
        %639 = vmatpush1.bf16.xpose.msra.mxu0 0
        %640 = vmatprep.subr.bf16.mxu0 0
        %641 = vmatpush1.bf16.xpose.msra.mxu0 0
        %642 = vmatprep.subr.bf16.mxu0 0
        %643 = vmatpush1.bf16.xpose.msra.mxu0 0
        %644 = vmatprep.mubr.bf16.mxu0 0
        %645 = vmatmul.mubr.bf16.gmra.mrb[0].mxu0 %v607
        %v646 = vpop.f32.mrb[0].mxu0
        %v647 = vadd.f32 0.0, %v646
        %v648 = vpop.f32.mrb[0].mxu0
        %v649 = vpop.f32.mrb[0].mxu0
        %v650 = vpop.f32.mrb[0].mxu0
        %651 = vdwg.mxu0
        %v652 = vsel %vm490, %v647, -inf
        %653 = vmax.xlane.f32.xlu0 %v652
        %v654 = vpop.xlane.xlu0 %653
        %v655 = vsub.f32 %v647, %v654
        %v656 = vmul.f32 %v655, 1.442695
        %v657 = vpow.pop %v656
        %v658 = vsel %vm490, %v657, 0.0
        %659 = vadd.xlane.f32.xlu0 %v658
        %v660 = vpop.xlane.xlu0 %659
        %v661 = vrcp.pop %v660
        %v662 = vmul.f32 %v657, %v661
        %v663 = vpack.c.bf16 %v662, %v662
        %664 = vrot.lane.b32.xlu0 %v489, 88
        %v665 = vpop.permute.xlu0 %664
        %v667 = vsel %vm490, %v663, 0
        %v670 = vsel %vm555, %v665, 0
        %672 = vmatprep.subr.bf16.mxu0 0
        %673 = vmatpush1.bf16.msra.mxu0 %v670
        %674 = vmatprep.subr.bf16.mxu0 0
        %675 = vmatpush1.bf16.msra.mxu0 0
        %676 = vmatprep.subr.bf16.mxu0 0
        %677 = vmatpush1.bf16.msra.mxu0 0
        %678 = vmatprep.subr.bf16.mxu0 0
        %679 = vmatpush1.bf16.msra.mxu0 0
        %680 = vmatprep.subr.bf16.mxu0 0
        %681 = vmatpush1.bf16.msra.mxu0 0
        %682 = vmatprep.subr.bf16.mxu0 0
        %683 = vmatpush1.bf16.msra.mxu0 0
        %684 = vmatprep.subr.bf16.mxu0 0
        %685 = vmatpush1.bf16.msra.mxu0 0
        %686 = vmatprep.subr.bf16.mxu0 0
        %687 = vmatpush1.bf16.msra.mxu0 0
        %688 = vmatprep.subr.bf16.mxu0 0
        %689 = vmatpush1.bf16.msra.mxu0 0
        %690 = vmatprep.subr.bf16.mxu0 0
        %691 = vmatpush1.bf16.msra.mxu0 0
        %692 = vmatprep.subr.bf16.mxu0 0
        %693 = vmatpush1.bf16.msra.mxu0 0
        %694 = vmatprep.subr.bf16.mxu0 0
        %695 = vmatpush1.bf16.msra.mxu0 0
        %696 = vmatprep.subr.bf16.mxu0 0
        %697 = vmatpush1.bf16.msra.mxu0 0
        %698 = vmatprep.subr.bf16.mxu0 0
        %699 = vmatpush1.bf16.msra.mxu0 0
        %700 = vmatprep.subr.bf16.mxu0 0
        %701 = vmatpush1.bf16.msra.mxu0 0
        %702 = vmatprep.subr.bf16.mxu0 0
        %703 = vmatpush1.bf16.msra.mxu0 0
        %704 = vmatprep.mubr.bf16.mxu0 0
        %705 = vmatmul.mubr.bf16.gmra.mrb[0].mxu0 %v667
        %v706 = vpop.f32.mrb[0].mxu0
        %v707 = vadd.f32 0.0, %v706
        %v708 = vpop.f32.mrb[0].mxu0
        %v709 = vpop.f32.mrb[0].mxu0
        %v710 = vpop.f32.mrb[0].mxu0
        %711 = vdwg.mxu0
        %v712 = vpack.c.bf16 %v707, %v707
        %s713 = scalar_lea.vmem [#allocation10], 4
        %v714 = vld [vmem:[%s713] sm:$0xf]
        %v716 = vsel %vm490, %v712, 0
        %v719 = vsel %vm555, %v714, 0
        %721 = vmatprep.subr.bf16.mxu0 0
        %722 = vmatpush1.bf16.msra.mxu0 %v719
        %723 = vmatprep.subr.bf16.mxu0 0
        %724 = vmatpush1.bf16.msra.mxu0 0
        %725 = vmatprep.subr.bf16.mxu0 0
        %726 = vmatpush1.bf16.msra.mxu0 0
        %727 = vmatprep.subr.bf16.mxu0 0
        %728 = vmatpush1.bf16.msra.mxu0 0
        %729 = vmatprep.subr.bf16.mxu0 0
        %730 = vmatpush1.bf16.msra.mxu0 0
        %731 = vmatprep.subr.bf16.mxu0 0
        %732 = vmatpush1.bf16.msra.mxu0 0
        %733 = vmatprep.subr.bf16.mxu0 0
        %734 = vmatpush1.bf16.msra.mxu0 0
        %735 = vmatprep.subr.bf16.mxu0 0
        %736 = vmatpush1.bf16.msra.mxu0 0
        %737 = vmatprep.subr.bf16.mxu0 0
        %738 = vmatpush1.bf16.msra.mxu0 0
        %739 = vmatprep.subr.bf16.mxu0 0
        %740 = vmatpush1.bf16.msra.mxu0 0
        %741 = vmatprep.subr.bf16.mxu0 0
        %742 = vmatpush1.bf16.msra.mxu0 0
        %743 = vmatprep.subr.bf16.mxu0 0
        %744 = vmatpush1.bf16.msra.mxu0 0
        %745 = vmatprep.subr.bf16.mxu0 0
        %746 = vmatpush1.bf16.msra.mxu0 0
        %747 = vmatprep.subr.bf16.mxu0 0
        %748 = vmatpush1.bf16.msra.mxu0 0
        %749 = vmatprep.subr.bf16.mxu0 0
        %750 = vmatpush1.bf16.msra.mxu0 0
        %751 = vmatprep.subr.bf16.mxu0 0
        %752 = vmatpush1.bf16.msra.mxu0 0
        %753 = vmatprep.mubr.bf16.mxu0 0
        %754 = vmatmul.mubr.bf16.gmra.mrb[0].mxu0 %v716
        %v755 = vpop.f32.mrb[0].mxu0
        %v756 = vadd.f32 0.0, %v755
        %v757 = vpop.f32.mrb[0].mxu0
        %v758 = vpop.f32.mrb[0].mxu0
        %v759 = vpop.f32.mrb[0].mxu0
        %760 = vdwg.mxu0
        %v762 = vsel %vm490, %v599, 0
        %v765 = vsel %vm555, %v600, 0
        %767 = vmatprep.subr.bf16.mxu0 0
        %768 = vmatpush1.bf16.msra.mxu0 %v765
        %769 = vmatprep.subr.bf16.mxu0 0
        %770 = vmatpush1.bf16.msra.mxu0 0
        %771 = vmatprep.subr.bf16.mxu0 0
        %772 = vmatpush1.bf16.msra.mxu0 0
        %773 = vmatprep.subr.bf16.mxu0 0
        %774 = vmatpush1.bf16.msra.mxu0 0
        %775 = vmatprep.subr.bf16.mxu0 0
        %776 = vmatpush1.bf16.msra.mxu0 0
        %777 = vmatprep.subr.bf16.mxu0 0
        %778 = vmatpush1.bf16.msra.mxu0 0
        %779 = vmatprep.subr.bf16.mxu0 0
        %780 = vmatpush1.bf16.msra.mxu0 0
        %781 = vmatprep.subr.bf16.mxu0 0
        %782 = vmatpush1.bf16.msra.mxu0 0
        %783 = vmatprep.subr.bf16.mxu0 0
        %784 = vmatpush1.bf16.msra.mxu0 0
        %785 = vmatprep.subr.bf16.mxu0 0
        %786 = vmatpush1.bf16.msra.mxu0 0
        %787 = vmatprep.subr.bf16.mxu0 0
        %788 = vmatpush1.bf16.msra.mxu0 0
        %789 = vmatprep.subr.bf16.mxu0 0
        %790 = vmatpush1.bf16.msra.mxu0 0
        %791 = vmatprep.subr.bf16.mxu0 0
        %792 = vmatpush1.bf16.msra.mxu0 0
        %793 = vmatprep.subr.bf16.mxu0 0
        %794 = vmatpush1.bf16.msra.mxu0 0
        %795 = vmatprep.subr.bf16.mxu0 0
        %796 = vmatpush1.bf16.msra.mxu0 0
        %797 = vmatprep.subr.bf16.mxu0 0
        %798 = vmatpush1.bf16.msra.mxu0 0
        %799 = vmatprep.mubr.bf16.mxu0 0
        %800 = vmatmul.mubr.bf16.gmra.mrb[0].mxu0 %v762
        %v801 = vpop.f32.mrb[0].mxu0
        %v802 = vadd.f32 %v756, %v801
        %v803 = vpop.f32.mrb[0].mxu0
        %v804 = vpop.f32.mrb[0].mxu0
        %v805 = vpop.f32.mrb[0].mxu0
        %806 = vdwg.mxu0
        %807 = vrot.lane.b32.xlu0 %v429, 112
        %v808 = vpop.permute.xlu0 %807
        %809 = vrot.lane.b32.xlu0 %v489, 112
        %v810 = vpop.permute.xlu0 %809
        %v812 = vsel %vm490, %v808, 0
        %v815 = vsel %vm490, %v810, 0
        %817 = vmatprep.subr.bf16.mxu0 0
        %818 = vmatpush1.bf16.xpose.msra.mxu0 %v815
        %819 = vmatprep.subr.bf16.mxu0 0
        %820 = vmatpush1.bf16.xpose.msra.mxu0 0
        %821 = vmatprep.subr.bf16.mxu0 0
        %822 = vmatpush1.bf16.xpose.msra.mxu0 0
        %823 = vmatprep.subr.bf16.mxu0 0
        %824 = vmatpush1.bf16.xpose.msra.mxu0 0
        %825 = vmatprep.subr.bf16.mxu0 0
        %826 = vmatpush1.bf16.xpose.msra.mxu0 0
        %827 = vmatprep.subr.bf16.mxu0 0
        %828 = vmatpush1.bf16.xpose.msra.mxu0 0
        %829 = vmatprep.subr.bf16.mxu0 0
        %830 = vmatpush1.bf16.xpose.msra.mxu0 0
        %831 = vmatprep.subr.bf16.mxu0 0
        %832 = vmatpush1.bf16.xpose.msra.mxu0 0
        %833 = vmatprep.subr.bf16.mxu0 0
        %834 = vmatpush1.bf16.xpose.msra.mxu0 0
        %835 = vmatprep.subr.bf16.mxu0 0
        %836 = vmatpush1.bf16.xpose.msra.mxu0 0
        %837 = vmatprep.subr.bf16.mxu0 0
        %838 = vmatpush1.bf16.xpose.msra.mxu0 0
        %839 = vmatprep.subr.bf16.mxu0 0
        %840 = vmatpush1.bf16.xpose.msra.mxu0 0
        %841 = vmatprep.subr.bf16.mxu0 0
        %842 = vmatpush1.bf16.xpose.msra.mxu0 0
        %843 = vmatprep.subr.bf16.mxu0 0
        %844 = vmatpush1.bf16.xpose.msra.mxu0 0
        %845 = vmatprep.subr.bf16.mxu0 0
        %846 = vmatpush1.bf16.xpose.msra.mxu0 0
        %847 = vmatprep.subr.bf16.mxu0 0
        %848 = vmatpush1.bf16.xpose.msra.mxu0 0
        %849 = vmatprep.mubr.bf16.mxu0 0
        %850 = vmatmul.mubr.bf16.gmra.mrb[0].mxu0 %v812
        %v851 = vpop.f32.mrb[0].mxu0
        %v852 = vadd.f32 0.0, %v851
        %v853 = vpop.f32.mrb[0].mxu0
        %v854 = vpop.f32.mrb[0].mxu0
        %v855 = vpop.f32.mrb[0].mxu0
        %856 = vdwg.mxu0
        %v857 = vsel %vm490, %v852, -inf
        %858 = vmax.xlane.f32.xlu0 %v857
        %v859 = vpop.xlane.xlu0 %858
        %v860 = vsub.f32 %v852, %v859
        %v861 = vmul.f32 %v860, 1.442695
        %v862 = vpow.pop %v861
        %v863 = vsel %vm490, %v862, 0.0
        %864 = vadd.xlane.f32.xlu0 %v863
        %v865 = vpop.xlane.xlu0 %864
        %v866 = vrcp.pop %v865
        %v867 = vmul.f32 %v862, %v866
        %v868 = vpack.c.bf16 %v867, %v867
        %869 = vrot.lane.b32.xlu0 %v489, 80
        %v870 = vpop.permute.xlu0 %869
        %v872 = vsel %vm490, %v868, 0
        %v875 = vsel %vm555, %v870, 0
        %877 = vmatprep.subr.bf16.mxu0 0
        %878 = vmatpush1.bf16.msra.mxu0 %v875
        %879 = vmatprep.subr.bf16.mxu0 0
        %880 = vmatpush1.bf16.msra.mxu0 0
        %881 = vmatprep.subr.bf16.mxu0 0
        %882 = vmatpush1.bf16.msra.mxu0 0
        %883 = vmatprep.subr.bf16.mxu0 0
        %884 = vmatpush1.bf16.msra.mxu0 0
        %885 = vmatprep.subr.bf16.mxu0 0
        %886 = vmatpush1.bf16.msra.mxu0 0
        %887 = vmatprep.subr.bf16.mxu0 0
        %888 = vmatpush1.bf16.msra.mxu0 0
        %889 = vmatprep.subr.bf16.mxu0 0
        %890 = vmatpush1.bf16.msra.mxu0 0
        %891 = vmatprep.subr.bf16.mxu0 0
        %892 = vmatpush1.bf16.msra.mxu0 0
        %893 = vmatprep.subr.bf16.mxu0 0
        %894 = vmatpush1.bf16.msra.mxu0 0
        %895 = vmatprep.subr.bf16.mxu0 0
        %896 = vmatpush1.bf16.msra.mxu0 0
        %897 = vmatprep.subr.bf16.mxu0 0
        %898 = vmatpush1.bf16.msra.mxu0 0
        %899 = vmatprep.subr.bf16.mxu0 0
        %900 = vmatpush1.bf16.msra.mxu0 0
        %901 = vmatprep.subr.bf16.mxu0 0
        %902 = vmatpush1.bf16.msra.mxu0 0
        %903 = vmatprep.subr.bf16.mxu0 0
        %904 = vmatpush1.bf16.msra.mxu0 0
        %905 = vmatprep.subr.bf16.mxu0 0
        %906 = vmatpush1.bf16.msra.mxu0 0
        %907 = vmatprep.subr.bf16.mxu0 0
        %908 = vmatpush1.bf16.msra.mxu0 0
        %909 = vmatprep.mubr.bf16.mxu0 0
        %910 = vmatmul.mubr.bf16.gmra.mrb[0].mxu0 %v872
        %v911 = vpop.f32.mrb[0].mxu0
        %v912 = vadd.f32 0.0, %v911
        %v913 = vpop.f32.mrb[0].mxu0
        %v914 = vpop.f32.mrb[0].mxu0
        %v915 = vpop.f32.mrb[0].mxu0
        %916 = vdwg.mxu0
        %v917 = vpack.c.bf16 %v912, %v912
        %s918 = scalar_lea.vmem [#allocation10], 8
        %v919 = vld [vmem:[%s918] sm:$0xf]
        %v921 = vsel %vm490, %v917, 0
        %v924 = vsel %vm555, %v919, 0
        %926 = vmatprep.subr.bf16.mxu0 0
        %927 = vmatpush1.bf16.msra.mxu0 %v924
        %928 = vmatprep.subr.bf16.mxu0 0
        %929 = vmatpush1.bf16.msra.mxu0 0
        %930 = vmatprep.subr.bf16.mxu0 0
        %931 = vmatpush1.bf16.msra.mxu0 0
        %932 = vmatprep.subr.bf16.mxu0 0
        %933 = vmatpush1.bf16.msra.mxu0 0
        %934 = vmatprep.subr.bf16.mxu0 0
        %935 = vmatpush1.bf16.msra.mxu0 0
        %936 = vmatprep.subr.bf16.mxu0 0
        %937 = vmatpush1.bf16.msra.mxu0 0
        %938 = vmatprep.subr.bf16.mxu0 0
        %939 = vmatpush1.bf16.msra.mxu0 0
        %940 = vmatprep.subr.bf16.mxu0 0
        %941 = vmatpush1.bf16.msra.mxu0 0
        %942 = vmatprep.subr.bf16.mxu0 0
        %943 = vmatpush1.bf16.msra.mxu0 0
        %944 = vmatprep.subr.bf16.mxu0 0
        %945 = vmatpush1.bf16.msra.mxu0 0
        %946 = vmatprep.subr.bf16.mxu0 0
        %947 = vmatpush1.bf16.msra.mxu0 0
        %948 = vmatprep.subr.bf16.mxu0 0
        %949 = vmatpush1.bf16.msra.mxu0 0
        %950 = vmatprep.subr.bf16.mxu0 0
        %951 = vmatpush1.bf16.msra.mxu0 0
        %952 = vmatprep.subr.bf16.mxu0 0
        %953 = vmatpush1.bf16.msra.mxu0 0
        %954 = vmatprep.subr.bf16.mxu0 0
        %955 = vmatpush1.bf16.msra.mxu0 0
        %956 = vmatprep.subr.bf16.mxu0 0
        %957 = vmatpush1.bf16.msra.mxu0 0
        %958 = vmatprep.mubr.bf16.mxu0 0
        %959 = vmatmul.mubr.bf16.gmra.mrb[0].mxu0 %v921
        %v960 = vpop.f32.mrb[0].mxu0
        %v961 = vadd.f32 0.0, %v960
        %v962 = vpop.f32.mrb[0].mxu0
        %v963 = vpop.f32.mrb[0].mxu0
        %v964 = vpop.f32.mrb[0].mxu0
        %965 = vdwg.mxu0
        %v966 = vadd.f32 %v802, %v961
        %967 = vrot.lane.b32.xlu0 %v429, 104
        %v968 = vpop.permute.xlu0 %967
        %969 = vrot.lane.b32.xlu0 %v489, 104
        %v970 = vpop.permute.xlu0 %969
        %v972 = vsel %vm490, %v968, 0
        %v975 = vsel %vm490, %v970, 0
        %977 = vmatprep.subr.bf16.mxu0 0
        %978 = vmatpush1.bf16.xpose.msra.mxu0 %v975
        %979 = vmatprep.subr.bf16.mxu0 0
        %980 = vmatpush1.bf16.xpose.msra.mxu0 0
        %981 = vmatprep.subr.bf16.mxu0 0
        %982 = vmatpush1.bf16.xpose.msra.mxu0 0
        %983 = vmatprep.subr.bf16.mxu0 0
        %984 = vmatpush1.bf16.xpose.msra.mxu0 0
        %985 = vmatprep.subr.bf16.mxu0 0
        %986 = vmatpush1.bf16.xpose.msra.mxu0 0
        %987 = vmatprep.subr.bf16.mxu0 0
        %988 = vmatpush1.bf16.xpose.msra.mxu0 0
        %989 = vmatprep.subr.bf16.mxu0 0
        %990 = vmatpush1.bf16.xpose.msra.mxu0 0
        %991 = vmatprep.subr.bf16.mxu0 0
        %992 = vmatpush1.bf16.xpose.msra.mxu0 0
        %993 = vmatprep.subr.bf16.mxu0 0
        %994 = vmatpush1.bf16.xpose.msra.mxu0 0
        %995 = vmatprep.subr.bf16.mxu0 0
        %996 = vmatpush1.bf16.xpose.msra.mxu0 0
        %997 = vmatprep.subr.bf16.mxu0 0
        %998 = vmatpush1.bf16.xpose.msra.mxu0 0
        %999 = vmatprep.subr.bf16.mxu0 0
        %1000 = vmatpush1.bf16.xpose.msra.mxu0 0
        %1001 = vmatprep.subr.bf16.mxu0 0
        %1002 = vmatpush1.bf16.xpose.msra.mxu0 0
        %1003 = vmatprep.subr.bf16.mxu0 0
        %1004 = vmatpush1.bf16.xpose.msra.mxu0 0
        %1005 = vmatprep.subr.bf16.mxu0 0
        %1006 = vmatpush1.bf16.xpose.msra.mxu0 0
        %1007 = vmatprep.subr.bf16.mxu0 0
        %1008 = vmatpush1.bf16.xpose.msra.mxu0 0
        %1009 = vmatprep.mubr.bf16.mxu0 0
        %1010 = vmatmul.mubr.bf16.gmra.mrb[0].mxu0 %v972
        %v1011 = vpop.f32.mrb[0].mxu0
        %v1012 = vadd.f32 0.0, %v1011
        %v1013 = vpop.f32.mrb[0].mxu0
        %v1014 = vpop.f32.mrb[0].mxu0
        %v1015 = vpop.f32.mrb[0].mxu0
        %1016 = vdwg.mxu0
        %v1017 = vsel %vm490, %v1012, -inf
        %1018 = vmax.xlane.f32.xlu0 %v1017
        %v1019 = vpop.xlane.xlu0 %1018
        %v1020 = vsub.f32 %v1012, %v1019
        %v1021 = vmul.f32 %v1020, 1.442695
        %v1022 = vpow.pop %v1021
        %v1023 = vsel %vm490, %v1022, 0.0
        %1024 = vadd.xlane.f32.xlu0 %v1023
        %v1025 = vpop.xlane.xlu0 %1024
        %v1026 = vrcp.pop %v1025
        %v1027 = vmul.f32 %v1022, %v1026
        %v1028 = vpack.c.bf16 %v1027, %v1027
        %1029 = vrot.lane.b32.xlu0 %v489, 72
        %v1030 = vpop.permute.xlu0 %1029
        %v1032 = vsel %vm490, %v1028, 0
        %v1035 = vsel %vm555, %v1030, 0
        %1037 = vmatprep.subr.bf16.mxu0 0
        %1038 = vmatpush1.bf16.msra.mxu0 %v1035
        %1039 = vmatprep.subr.bf16.mxu0 0
        %1040 = vmatpush1.bf16.msra.mxu0 0
        %1041 = vmatprep.subr.bf16.mxu0 0
        %1042 = vmatpush1.bf16.msra.mxu0 0
        %1043 = vmatprep.subr.bf16.mxu0 0
        %1044 = vmatpush1.bf16.msra.mxu0 0
        %1045 = vmatprep.subr.bf16.mxu0 0
        %1046 = vmatpush1.bf16.msra.mxu0 0
        %1047 = vmatprep.subr.bf16.mxu0 0
        %1048 = vmatpush1.bf16.msra.mxu0 0
        %1049 = vmatprep.subr.bf16.mxu0 0
        %1050 = vmatpush1.bf16.msra.mxu0 0
        %1051 = vmatprep.subr.bf16.mxu0 0
        %1052 = vmatpush1.bf16.msra.mxu0 0
        %1053 = vmatprep.subr.bf16.mxu0 0
        %1054 = vmatpush1.bf16.msra.mxu0 0
        %1055 = vmatprep.subr.bf16.mxu0 0
        %1056 = vmatpush1.bf16.msra.mxu0 0
        %1057 = vmatprep.subr.bf16.mxu0 0
        %1058 = vmatpush1.bf16.msra.mxu0 0
        %1059 = vmatprep.subr.bf16.mxu0 0
        %1060 = vmatpush1.bf16.msra.mxu0 0
        %1061 = vmatprep.subr.bf16.mxu0 0
        %1062 = vmatpush1.bf16.msra.mxu0 0
        %1063 = vmatprep.subr.bf16.mxu0 0
        %1064 = vmatpush1.bf16.msra.mxu0 0
        %1065 = vmatprep.subr.bf16.mxu0 0
        %1066 = vmatpush1.bf16.msra.mxu0 0
        %1067 = vmatprep.subr.bf16.mxu0 0
        %1068 = vmatpush1.bf16.msra.mxu0 0
        %1069 = vmatprep.mubr.bf16.mxu0 0
        %1070 = vmatmul.mubr.bf16.gmra.mrb[0].mxu0 %v1032
        %v1071 = vpop.f32.mrb[0].mxu0
        %v1072 = vadd.f32 0.0, %v1071
        %v1073 = vpop.f32.mrb[0].mxu0
        %v1074 = vpop.f32.mrb[0].mxu0
        %v1075 = vpop.f32.mrb[0].mxu0
        %1076 = vdwg.mxu0
        %v1077 = vpack.c.bf16 %v1072, %v1072
        %s1078 = scalar_lea.vmem [#allocation10], 12
        %v1079 = vld [vmem:[%s1078] sm:$0xf]
        %v1081 = vsel %vm490, %v1077, 0
        %v1084 = vsel %vm555, %v1079, 0
        %1086 = vmatprep.subr.bf16.mxu0 0
        %1087 = vmatpush1.bf16.msra.mxu0 %v1084
        %1088 = vmatprep.subr.bf16.mxu0 0
        %1089 = vmatpush1.bf16.msra.mxu0 0
        %1090 = vmatprep.subr.bf16.mxu0 0
        %1091 = vmatpush1.bf16.msra.mxu0 0
        %1092 = vmatprep.subr.bf16.mxu0 0
        %1093 = vmatpush1.bf16.msra.mxu0 0
        %1094 = vmatprep.subr.bf16.mxu0 0
        %1095 = vmatpush1.bf16.msra.mxu0 0
        %1096 = vmatprep.subr.bf16.mxu0 0
        %1097 = vmatpush1.bf16.msra.mxu0 0
        %1098 = vmatprep.subr.bf16.mxu0 0
        %1099 = vmatpush1.bf16.msra.mxu0 0
        %1100 = vmatprep.subr.bf16.mxu0 0
        %1101 = vmatpush1.bf16.msra.mxu0 0
        %1102 = vmatprep.subr.bf16.mxu0 0
        %1103 = vmatpush1.bf16.msra.mxu0 0
        %1104 = vmatprep.subr.bf16.mxu0 0
        %1105 = vmatpush1.bf16.msra.mxu0 0
        %1106 = vmatprep.subr.bf16.mxu0 0
        %1107 = vmatpush1.bf16.msra.mxu0 0
        %1108 = vmatprep.subr.bf16.mxu0 0
        %1109 = vmatpush1.bf16.msra.mxu0 0
        %1110 = vmatprep.subr.bf16.mxu0 0
        %1111 = vmatpush1.bf16.msra.mxu0 0
        %1112 = vmatprep.subr.bf16.mxu0 0
        %1113 = vmatpush1.bf16.msra.mxu0 0
        %1114 = vmatprep.subr.bf16.mxu0 0
        %1115 = vmatpush1.bf16.msra.mxu0 0
        %1116 = vmatprep.subr.bf16.mxu0 0
        %1117 = vmatpush1.bf16.msra.mxu0 0
        %1118 = vmatprep.mubr.bf16.mxu0 0
        %1119 = vmatmul.mubr.bf16.gmra.mrb[0].mxu0 %v1081
        %v1120 = vpop.f32.mrb[0].mxu0
        %v1121 = vadd.f32 0.0, %v1120
        %v1122 = vpop.f32.mrb[0].mxu0
        %v1123 = vpop.f32.mrb[0].mxu0
        %v1124 = vpop.f32.mrb[0].mxu0
        %1125 = vdwg.mxu0
        %v1126 = vadd.f32 %v966, %v1121
        %v1127 = vld [vmem:[%s5] sm:$0x1]
        %v1129 = vlaneseq
        %v1130 = vshrl.u32 %v1129, 7
        %v1131 = vsub.s32 0, %v1130
        %v1132 = vrot.slane %v1127, %v1131
        %v1134 = vadd.f32 %v1126, %v1132
        %1135 = vst [vmem:[%s363] sm:$0xff] %v1134
        %s1136 = sand.u32 %s187, 1
        %s1137 = scalar_lea.sflag [#allocation4], %s1136
        %s1138 = sand.u32 %s187, 1
        %s1139 = smul.addr %s1138, 8
        %s1140 = scalar_lea.vmem [#allocation11], %s1139
        // Predicated region
        $region65: #{tpu_custom_call.1} parent=43 // pred_check
          %p1141 = pneg %p197
        $region66: #{tpu_custom_call.1} parent=43 // pred_check_branch
          %1143 = sbr.rel (%p1141) target = $region68
        $region67: #{tpu_custom_call.1} parent=43 // pred_region
          %s1145 = ssub.s32 128, 128
          %1146 = vsyncadd %s1137, %s1145
          %s1147 = sadd.s32 %s32, %s31
          %s1148 = smul.addr %s1147, 128
          %s1149 = scalar_lea.hbm %s6, %s1148
          %s1151 = sshll.u32 %s1140, 4
          %s1152 = int_to_ptr.vmem [resolvable:$true] %s1151
          %1154 = dma.vmem_to_hbm [thread:$0]  %s1152, 128, %s1149, %s1137
        $region68: #{tpu_custom_call.1} parent=43 // pred_fallthru
          _
      $region44: #{tpu_custom_call.1} parent=5 // pred_fallthru
        _
      %p1155 = scmp.le.s32.totalorder 2, %s22
      // Predicated region
      $region69: #{tpu_custom_call.1} parent=5 // pred_check
        %p1156 = pneg %p1155
      $region70: #{tpu_custom_call.1} parent=5 // pred_check_branch
        %1158 = sbr.rel (%p1156) target = $region72
      $region71: #{tpu_custom_call.1} parent=5 // pred_region
        %s1159 = ssub.s32 %s22, 2
        // Predicated region
        $region73: #{tpu_custom_call.1} parent=71 // pred_check
          %p1160 = pneg %p203
        $region74: #{tpu_custom_call.1} parent=71 // pred_check_branch
          %1162 = sbr.rel (%p1160) target = $region76
        $region75: #{tpu_custom_call.1} parent=71 // pred_region
          %s1163 = sand.u32 %s188, 1
          %s1164 = scalar_lea.sflag [#allocation4], %s1163
          %s1165 = sand.u32 %s188, 1
          %s1166 = smul.addr %s1165, 8
          %s1167 = scalar_lea.vmem [#allocation11], %s1166
          %1168 = dma.done %s1164, 128
        $region76: #{tpu_custom_call.1} parent=71 // pred_fallthru
          _
      $region72: #{tpu_custom_call.1} parent=5 // pred_fallthru
        _
    $region6: #{tpu_custom_call.1} parent=1 // loop_footer
      %s26 = sadd.s32 1, %s22
    $region7: #{tpu_custom_call.1} parent=1 // loop_footer_branch
      %21 = sbr.rel target = $region3
    $region8: #{tpu_custom_call.1} parent=1 // loop_exit
      _
    %1169 = vsyncpa [#allocation3], 1
    %s1170 = scalar_lea.sflag [#allocation3], 1
    %1171 = vsyncpa %s1170, 1
    %1172 = vsyncpa [#allocation6], 1
    %s1173 = scalar_lea.sflag [#allocation6], 1
    %1174 = vsyncpa %s1173, 1
    %1175 = vsyncpa [#allocation9], 1
    %1176 = vsyncpa [#allocation4], 1
    %s1177 = scalar_lea.sflag [#allocation4], 1
    %1178 = vsyncpa %s1177, 1

</llo_original>
